<compile_context>
chip_gen: v5e
topology: v5e:2x2
jax: 0.10.0
libtpu: 0.0.40
codegen_flags: <defaults>
</compile_context>

<pallas_src>
import functools

import jax
import jax.numpy as jnp
import numpy as np
from jax.experimental import pallas as pl
from jax.experimental.pallas import tpu as pltpu

# Matches torch masked_fill_(-inf).  Swap for -1e30 if the downstream softmax
# must never see an all -inf row.
NEG_FILL = -jnp.inf


def _round_up(x, m):
    return (x + m - 1) // m * m


def _pad_to(x, axis, new_size):
    pad = new_size - x.shape[axis]
    if pad == 0:
        return x
    widths = [(0, 0)] * x.ndim
    widths[axis] = (0, pad)
    return jnp.pad(x, widths)


def _output_kernel(slen_ref,     # [B]  int32  SMEM (scalar prefetch)
                   bic_ref,      # [1]  f32    SMEM (scalar prefetch)  is_copy bias
                   dec_ref,      # [1, bt, Hp]          bf16  decoder tile
                   idx_ref,      # [1, bt, 1]           f32   copy index in {0,1}
                   enc_ref,      # [1, Te_pad, Hp]      bf16  encoder_output
                   semb_ref,     # [1, S_pad, Hp]       bf16  sample embeddings
                   cmask_ref,    # [1, 1, Te_pad]       int32 copy mask (0-padded)
                   w_ic_ref,     # [1, Hp]              bf16  is_copy weight
                   w_gate_ref,   # [Hp, 2Hp]            bf16  [wtd | wgd]
                   b_gate_ref,   # [1, 2Hp]             f32   [bt  | bg ]
                   cs_gate_ref,  # [2, 2Hp]             f32   copy_emb @ [wtc|wgc]
                   is_copy_ref,  # [1, 1, bt]           f32   out
                   scores_ref,   # [1, bt, Te_pad+S_pad] f32  out
                   *, hp, te_pad, s_pad, sample_mode):
    dec = dec_ref[0]                       # [bt, Hp] bf16
    b_ic = bic_ref[0]

    # ---- is_copy = Linear(H, 1)(decoder_output), lane-dense [1, bt] ----
    ic_row = jax.lax.dot_general(w_ic_ref[...], dec, (((1,), (1,)), ((), ())),
                                 preferred_element_type=jnp.float32) + b_ic
    is_copy_ref[0] = ic_row

    # ---- copy index: streamed (teacher forcing) or derived from is_copy ----
    if sample_mode:
        ic_col = jax.lax.dot_general(dec, w_ic_ref[...], (((1,), (1,)), ((), ())),
                                     preferred_element_type=jnp.float32) + b_ic
        idx = (ic_col > 0.5).astype(jnp.float32)          # [bt, 1]
    else:
        idx = idx_ref[0]                                  # [bt, 1]

    # ---- Update(dec, copy_state): one fused [Hp, 2Hp] matmul; copy_state
    #      contribution is a per-row select from the 2-row cs_gate table. ----
    pre = jnp.dot(dec, w_gate_ref[...], preferred_element_type=jnp.float32)
    cs0 = cs_gate_ref[0:1, :]                             # [1, 2Hp]
    cs1 = cs_gate_ref[1:2, :]                             # [1, 2Hp]
    pre = pre + b_gate_ref[...] + cs0 * (1.0 - idx) + cs1 * idx
    t = jnp.tanh(pre[:, :hp])                             # lane-aligned split
    g = jax.nn.sigmoid(pre[:, hp:])
    upd = (dec * (1.0 - g) + t * g).astype(jnp.bfloat16)  # [bt, Hp]

    # ---- copy scores vs encoder: 128-aligned lane-dense store ----
    copy_sc = jax.lax.dot_general(upd, enc_ref[0], (((1,), (1,)), ((), ())),
                                  preferred_element_type=jnp.float32)
    scores_ref[0, :, :te_pad] = jnp.where(cmask_ref[0] > 0, copy_sc, NEG_FILL)

    # ---- sample scores vs sample embeddings: length mask from iota + SMEM ----
    samp_sc = jax.lax.dot_general(upd, semb_ref[0], (((1,), (1,)), ((), ())),
                                  preferred_element_type=jnp.float32)
    slen = slen_ref[pl.program_id(0)]
    col = jax.lax.broadcasted_iota(jnp.int32, (1, s_pad), 1)
    scores_ref[0, :, te_pad:] = jnp.where(col < slen, samp_sc, NEG_FILL)


def prepare_params(params):
    """Fold/pad/cast parameters once; hoist out of the per-step hot path."""
    H = params["wtd"].shape[0]
    Hp = _round_up(H, 128)
    bf = jnp.bfloat16

    w_ic = jnp.zeros((1, Hp), bf).at[:, :H].set(params["w_is_copy"].astype(bf))
    b_ic = params["b_is_copy"].reshape(1).astype(jnp.float32)

    w_gate = jnp.zeros((Hp, 2 * Hp), jnp.float32)
    w_gate = w_gate.at[:H, :H].set(params["wtd"])
    w_gate = w_gate.at[:H, Hp:Hp + H].set(params["wgd"])
    w_gate = w_gate.astype(bf)

    b_gate = jnp.zeros((1, 2 * Hp), jnp.float32)
    b_gate = b_gate.at[:, :H].set(params["bt"])
    b_gate = b_gate.at[:, Hp:Hp + H].set(params["bg"])

    cs = params["copy_embedding"]                                      # [2, H]
    cs_gate = jnp.zeros((2, 2 * Hp), jnp.float32)
    cs_gate = cs_gate.at[:, :H].set(cs @ params["wtc"])
    cs_gate = cs_gate.at[:, Hp:Hp + H].set(cs @ params["wgc"])

    semb_table = _pad_to(params["sample_embedding"], 1, Hp).astype(bf)  # [V, Hp]

    return dict(H=H, Hp=Hp, w_ic=w_ic, b_ic=b_ic, w_gate=w_gate,
                b_gate=b_gate, cs_gate=cs_gate, semb_table=semb_table)


def output_forward(prep, decoder_output, encoder_output, copy_mask,
                   sample_mask, sample_length, is_sample=False,
                   copy_target=None, td_tile=128):
    B, Td, H = decoder_output.shape
    Te = encoder_output.shape[1]
    S = sample_mask.shape[-1]
    Hp = prep["Hp"]
    assert H == prep["H"]
    bf = jnp.bfloat16

    Te_pad = _round_up(Te, 128)
    S_pad = _round_up(S, 128)
    if Td <= td_tile:
        bt = _round_up(Td, 16)
        Td_pad = bt
    else:
        bt = td_tile
        Td_pad = _round_up(Td, td_tile)
    n_td = Td_pad // bt
    TS = Te_pad + S_pad

    # bf16 streaming of the large operands; pads are zeros so they never
    # contribute to the f32-accumulated matmuls.
    dec = _pad_to(_pad_to(decoder_output, 1, Td_pad), 2, Hp).astype(bf)
    # NOTE: enc / sample-embedding prep is per-call; when encoder_output and
    # sample_mask are fixed across decode steps, hoist these two lines out of
    # the decode loop.
    enc = _pad_to(_pad_to(encoder_output, 1, Te_pad), 2, Hp).astype(bf)
    semb = _pad_to(prep["semb_table"][sample_mask], 1, S_pad)          # [B,S_pad,Hp]

    cmask = _pad_to(copy_mask.astype(jnp.int32), 1, Te_pad).reshape(B, 1, Te_pad)

    if is_sample:
        # copy_idx is derived inside the kernel from the same is_copy logits
        # (no duplicate read of decoder_output); the stream below is a dummy.
        idx = jnp.zeros((B, Td_pad, 1), jnp.float32)
    else:
        idx = _pad_to((copy_target == 1).astype(jnp.float32), 1, Td_pad)
        idx = idx.reshape(B, Td_pad, 1)

    slen = sample_length.reshape(-1).astype(jnp.int32)                 # [B]

    # ---- VMEM budget (double-buffered blocks + f32 compute temporaries) ----
    def tile_bytes(shape, dtype):
        s = list(shape)
        s[-1] = _round_up(s[-1], 128)
        if len(s) >= 2:
            s[-2] = _round_up(s[-2], 8)
        n = 1
        for d in s:
            n *= d
        return n * jnp.dtype(dtype).itemsize

    blk = (tile_bytes((1, bt, Hp), bf) + tile_bytes((1, bt, 1), jnp.float32)
           + tile_bytes((1, Te_pad, Hp), bf) + tile_bytes((1, S_pad, Hp), bf)
           + tile_bytes((1, 1, Te_pad), jnp.int32) + tile_bytes((1, Hp), bf)
           + tile_bytes((Hp, 2 * Hp), bf) + tile_bytes((1, 2 * Hp), jnp.float32)
           + tile_bytes((2, 2 * Hp), jnp.float32)
           + tile_bytes((1, 1, bt), jnp.float32) + tile_bytes((1, bt, TS), jnp.float32))
    est = (2 * blk + 6 * tile_bytes((bt, TS), jnp.float32)
           + 4 * tile_bytes((bt, 2 * Hp), jnp.float32) + (2 << 20))
    vmem_limit = int(min(max(est, 32 << 20), 64 << 20))

    flops = 2 * B * Td_pad * Hp * (2 * Hp + Te_pad + S_pad + 1 + (1 if is_sample else 0))
    cost = pl.CostEstimate(
        flops=int(flops),
        transcendentals=int(B * Td_pad * 2 * Hp),
        bytes_accessed=int(dec.size * 2 + enc.size * 2 + semb.size * 2
                           + cmask.size * 4 + idx.size * 4
                           + B * Td_pad * 4 + B * Td_pad * TS * 4),
    )

    kernel = functools.partial(_output_kernel, hp=Hp, te_pad=Te_pad,
                               s_pad=S_pad, sample_mode=is_sample)
    const2 = lambda b, t, *_: (0, 0)

    is_copy3, scores = pl.pallas_call(
        kernel,
        out_shape=(
            jax.ShapeDtypeStruct((B, 1, Td_pad), jnp.float32),
            jax.ShapeDtypeStruct((B, Td_pad, TS), jnp.float32),
        ),
        grid_spec=pltpu.PrefetchScalarGridSpec(
            num_scalar_prefetch=2,                 # sample_length, b_is_copy
            grid=(B, n_td),
            in_specs=[
                pl.BlockSpec((1, bt, Hp), lambda b, t, *_: (b, t, 0)),      # dec
                pl.BlockSpec((1, bt, 1), lambda b, t, *_: (b, t, 0)),       # copy idx
                pl.BlockSpec((1, Te_pad, Hp), lambda b, t, *_: (b, 0, 0)),  # encoder
                pl.BlockSpec((1, S_pad, Hp), lambda b, t, *_: (b, 0, 0)),   # sample emb
                pl.BlockSpec((1, 1, Te_pad), lambda b, t, *_: (b, 0, 0)),   # copy mask
                pl.BlockSpec((1, Hp), const2),                              # w_is_copy
                pl.BlockSpec((Hp, 2 * Hp), const2),                         # fused gate W
                pl.BlockSpec((1, 2 * Hp), const2),                          # fused gate b
                pl.BlockSpec((2, 2 * Hp), const2),                          # cs gate table
            ],
            out_specs=[
                pl.BlockSpec((1, 1, bt), lambda b, t, *_: (b, 0, t)),
                pl.BlockSpec((1, bt, TS), lambda b, t, *_: (b, t, 0)),
            ],
        ),
        compiler_params=pltpu.CompilerParams(
            dimension_semantics=("parallel", "parallel"),
            vmem_limit_bytes=vmem_limit),
        cost_estimate=cost,
    )(slen, prep["b_ic"], dec, idx, enc, semb, cmask,
      prep["w_ic"], prep["w_gate"], prep["b_gate"], prep["cs_gate"])

    is_copy = is_copy3[:, 0, :Td]
    copy_output = scores[:, :Td, :Te]
    sample_output = scores[:, :Td, Te_pad:Te_pad + S]
    return is_copy, copy_output, sample_output


def reference(params, dec, enc, copy_mask, sample_mask, sample_length,
              copy_target=None, is_sample=False):
    """Pure-JAX reference mirroring the PyTorch forward."""
    ic = jnp.einsum("bth,oh->bto", dec, params["w_is_copy"]) + params["b_is_copy"]
    is_copy = ic[..., 0]
    if is_sample:
        ct = (is_copy > 0.5).astype(jnp.int32)
    else:
        ct = (copy_target == 1).astype(jnp.int32)
    cs = params["copy_embedding"][ct]
    t = jnp.tanh(jnp.einsum("bth,hk->btk", dec, params["wtd"])
                 + jnp.einsum("bth,hk->btk", cs, params["wtc"]) + params["bt"])
    g = jax.nn.sigmoid(jnp.einsum("bth,hk->btk", dec, params["wgd"])
                       + jnp.einsum("bth,hk->btk", cs, params["wgc"]) + params["bg"])
    upd = dec * (1.0 - g) + t * g
    copy_scores = jnp.einsum("bth,bsh->bts", upd, enc)
    copy_out = jnp.where(copy_mask[:, None, :], copy_scores, -jnp.inf)
    semb = params["sample_embedding"][sample_mask]
    samp_scores = jnp.einsum("bth,bsh->bts", upd, semb)
    len_mask = jnp.arange(sample_mask.shape[-1])[None, :] < sample_length[:, None]
    sample_out = jnp.where(len_mask[:, None, :], samp_scores, -jnp.inf)
    return is_copy, copy_out, sample_out


if __name__ == "__main__":
    B, Td, Te, H, S, V = 2, 8, 16, 32, 8, 40

    key = jax.random.PRNGKey(0)
    keys = jax.random.split(key, 12)

    params = {
        "w_is_copy":        0.1 * jax.random.normal(keys[0], (1, H), jnp.float32),
        "b_is_copy":        0.1 * jax.random.normal(keys[1], (1,), jnp.float32),
        "copy_embedding":   0.1 * jax.random.normal(keys[2], (2, H), jnp.float32),
        "wtd":              0.1 * jax.random.normal(keys[3], (H, H), jnp.float32),
        "wtc":              0.1 * jax.random.normal(keys[4], (H, H), jnp.float32),
        "bt":               0.1 * jax.random.normal(keys[5], (1, H), jnp.float32),
        "wgd":              0.1 * jax.random.normal(keys[6], (H, H), jnp.float32),
        "wgc":              0.1 * jax.random.normal(keys[7], (H, H), jnp.float32),
        "bg":               0.1 * jax.random.normal(keys[8], (1, H), jnp.float32),
        "sample_embedding": 0.1 * jax.random.normal(keys[9], (V, H), jnp.float32),
    }

    decoder_output = jax.random.normal(keys[10], (B, Td, H), jnp.float32)
    encoder_output = jax.random.normal(keys[11], (B, Te, H), jnp.float32)
    copy_mask = jnp.array(np.arange(Te)[None, :] < np.array([12, 16])[:, None])  # [B, Te] bool
    sample_mask = jnp.arange(B * S, dtype=jnp.int32).reshape(B, S) % V           # [B, S] vocab ids
    sample_length = jnp.array([5, 8], dtype=jnp.int32)                           # [B]
    copy_target = (jnp.arange(B * Td).reshape(B, Td) % 3).astype(jnp.int32)      # [B, Td]

    prep = prepare_params(params)

    # ---- teacher-forcing path vs pure-JAX reference ----
    out = output_forward(prep, decoder_output, encoder_output, copy_mask,
                         sample_mask, sample_length, is_sample=False,
                         copy_target=copy_target)
    out = jax.block_until_ready(out)
    ref = reference(params, decoder_output, encoder_output, copy_mask,
                    sample_mask, sample_length, copy_target=copy_target)
    # bf16-streamed MXU matmuls vs f32 reference math: loose but bug-catching tol.
    for o, r in zip(out, ref):
        np.testing.assert_allclose(np.asarray(o), np.asarray(r), rtol=2e-2, atol=2e-2)

    # ---- sampling path: exercise the in-kernel copy-index derivation ----
    out_s = output_forward(prep, decoder_output, encoder_output, copy_mask,
                           sample_mask, sample_length, is_sample=True)
    out_s = jax.block_until_ready(out_s)
    assert out_s[0].shape == (B, Td)
    assert out_s[1].shape == (B, Td, Te)
    assert out_s[2].shape == (B, Td, S)

    print("KERNEL_OK")
</pallas_src>

<mosaic_0001>
module attributes {stable_mosaic.version = 11 : i64} {
  func.func @_output_kernel(%arg0: i32, %arg1: i32, %arg2: memref<2xi32, #tpu.memory_space<smem>>, %arg3: memref<1xf32, #tpu.memory_space<smem>>, %arg4: memref<1x16x128xbf16, #tpu.memory_space<vmem>>, %arg5: memref<1x16x1xf32, #tpu.memory_space<vmem>>, %arg6: memref<1x128x128xbf16, #tpu.memory_space<vmem>>, %arg7: memref<1x128x128xbf16, #tpu.memory_space<vmem>>, %arg8: memref<1x1x128xi32, #tpu.memory_space<vmem>>, %arg9: memref<1x128xbf16, #tpu.memory_space<vmem>>, %arg10: memref<128x256xbf16, #tpu.memory_space<vmem>>, %arg11: memref<1x256xf32, #tpu.memory_space<vmem>>, %arg12: memref<2x256xf32, #tpu.memory_space<vmem>>, %arg13: memref<1x1x16xf32, #tpu.memory_space<vmem>>, %arg14: memref<1x16x256xf32, #tpu.memory_space<vmem>>) attributes {dimension_semantics = [#tpu.dimension_semantics<parallel>, #tpu.dimension_semantics<parallel>], iteration_bounds = array<i64: 2, 1>, scalar_prefetch = 2 : i64, scratch_operands = 0 : i64, tpu.core_type = #tpu.core_type<tc>, window_params = [{transform_indices = @transform_0, window_bounds = array<i64: 1, 16, 128>}, {transform_indices = @transform_1, window_bounds = array<i64: 1, 16, 1>}, {transform_indices = @transform_2, window_bounds = array<i64: 1, 128, 128>}, {transform_indices = @transform_3, window_bounds = array<i64: 1, 128, 128>}, {transform_indices = @transform_4, window_bounds = array<i64: 1, 1, 128>}, {pipeline_mode = #tpu.pipeline_mode<synchronous>, transform_indices = @transform_5, window_bounds = array<i64: 1, 128>}, {pipeline_mode = #tpu.pipeline_mode<synchronous>, transform_indices = @transform_6, window_bounds = array<i64: 128, 256>}, {pipeline_mode = #tpu.pipeline_mode<synchronous>, transform_indices = @transform_7, window_bounds = array<i64: 1, 256>}, {pipeline_mode = #tpu.pipeline_mode<synchronous>, transform_indices = @transform_8, window_bounds = array<i64: 2, 256>}, {transform_indices = @transform_9, window_bounds = array<i64: 1, 1, 16>}, {transform_indices = @transform_10, window_bounds = array<i64: 1, 16, 256>}]} {
    %c0 = arith.constant 0 : index
    %c0_0 = arith.constant 0 : index
    %c0_1 = arith.constant 0 : index
    %0 = vector.load %arg4[%c0, %c0_0, %c0_1] : memref<1x16x128xbf16, #tpu.memory_space<vmem>>, vector<1x16x128xbf16>
    %1 = vector.shape_cast %0 : vector<1x16x128xbf16> to vector<16x128xbf16>
    %c0_2 = arith.constant 0 : index
    %2 = memref.load %arg3[%c0_2] : memref<1xf32, #tpu.memory_space<smem>>
    %c0_3 = arith.constant 0 : index
    %c0_4 = arith.constant 0 : index
    %3 = vector.load %arg9[%c0_3, %c0_4] : memref<1x128xbf16, #tpu.memory_space<vmem>>, vector<1x128xbf16>
    %cst = arith.constant dense<0.000000e+00> : vector<1x16xf32>
    %4 = tpu.matmul %3, %1, %cst {dimension_numbers = #tpu.dot_dimension_numbers<[1], [1], [0], [0], [0, 0, 1, 0], [], []>} : vector<1x128xbf16>, vector<16x128xbf16>, vector<1x16xf32> -> vector<1x16xf32>
    %5 = vector.broadcast %2 : f32 to vector<1x16xf32>
    %6 = arith.addf %4, %5 : vector<1x16xf32>
    %c0_5 = arith.constant 0 : index
    %c0_6 = arith.constant 0 : index
    %c0_7 = arith.constant 0 : index
    %7 = vector.load %arg13[%c0_5, %c0_6, %c0_7] : memref<1x1x16xf32, #tpu.memory_space<vmem>>, vector<1x1x16xf32>
    %8 = vector.shape_cast %7 : vector<1x1x16xf32> to vector<1x16xf32>
    %9 = vector.shape_cast %6 : vector<1x16xf32> to vector<1x1x16xf32>
    tpu.vector_store %arg13[%c0_5, %c0_6, %c0_7], %9 {strides = array<i32>} : memref<1x1x16xf32, #tpu.memory_space<vmem>>, vector<1x1x16xf32>,
    %c0_8 = arith.constant 0 : index
    %c0_9 = arith.constant 0 : index
    %c0_10 = arith.constant 0 : index
    %10 = vector.load %arg5[%c0_8, %c0_9, %c0_10] : memref<1x16x1xf32, #tpu.memory_space<vmem>>, vector<1x16x1xf32>
    %11 = vector.shape_cast %10 : vector<1x16x1xf32> to vector<16x1xf32>
    %c0_11 = arith.constant 0 : index
    %c0_12 = arith.constant 0 : index
    %12 = vector.load %arg10[%c0_11, %c0_12] : memref<128x256xbf16, #tpu.memory_space<vmem>>, vector<128x256xbf16>
    %cst_13 = arith.constant dense<0.000000e+00> : vector<16x256xf32>
    %13 = tpu.matmul %1, %12, %cst_13 {dimension_numbers = #tpu.dot_dimension_numbers<[1], [0], [0], [1], [0, 0, 1, 1], [], []>} : vector<16x128xbf16>, vector<128x256xbf16>, vector<16x256xf32> -> vector<16x256xf32>
    %c0_14 = arith.constant 0 : index
    %c0_15 = arith.constant 0 : index
    %14 = vector.load %arg12[%c0_14, %c0_15] : memref<2x256xf32, #tpu.memory_space<vmem>>, vector<1x256xf32>
    %c1 = arith.constant 1 : index
    %c0_16 = arith.constant 0 : index
    %15 = vector.load %arg12[%c1, %c0_16] : memref<2x256xf32, #tpu.memory_space<vmem>>, vector<1x256xf32>
    %c0_17 = arith.constant 0 : index
    %c0_18 = arith.constant 0 : index
    %16 = vector.load %arg11[%c0_17, %c0_18] : memref<1x256xf32, #tpu.memory_space<vmem>>, vector<1x256xf32>
    %17 = vector.broadcast %16 : vector<1x256xf32> to vector<16x256xf32>
    %18 = arith.addf %13, %17 : vector<16x256xf32>
    %cst_19 = arith.constant 1.000000e+00 : f32
    %19 = vector.broadcast %cst_19 : f32 to vector<16x1xf32>
    %20 = arith.subf %19, %11 : vector<16x1xf32>
    %21 = vector.broadcast %14 : vector<1x256xf32> to vector<16x256xf32>
    %22 = vector.broadcast %20 : vector<16x1xf32> to vector<16x256xf32>
    %23 = arith.mulf %21, %22 : vector<16x256xf32>
    %24 = arith.addf %18, %23 : vector<16x256xf32>
    %25 = vector.broadcast %15 : vector<1x256xf32> to vector<16x256xf32>
    %26 = vector.broadcast %11 : vector<16x1xf32> to vector<16x256xf32>
    %27 = arith.mulf %25, %26 : vector<16x256xf32>
    %28 = arith.addf %24, %27 : vector<16x256xf32>
    %29 = vector.extract_strided_slice %28 {offsets = [0, 0], sizes = [16, 128], strides = [1, 1]} : vector<16x256xf32> to vector<16x128xf32>
    %30 = math.tanh %29 : vector<16x128xf32>
    %31 = vector.extract_strided_slice %28 {offsets = [0, 128], sizes = [16, 128], strides = [1, 1]} : vector<16x256xf32> to vector<16x128xf32>
    %32 = arith.negf %31 : vector<16x128xf32>
    %33 = math.exp %32 : vector<16x128xf32>
    %cst_20 = arith.constant 1.000000e+00 : f32
    %34 = vector.broadcast %cst_20 : f32 to vector<16x128xf32>
    %35 = arith.addf %34, %33 : vector<16x128xf32>
    %36 = arith.divf %34, %35 : vector<16x128xf32>
    %cst_21 = arith.constant 1.000000e+00 : f32
    %37 = vector.broadcast %cst_21 : f32 to vector<16x128xf32>
    %38 = arith.subf %37, %36 : vector<16x128xf32>
    %39 = arith.extf %1 : vector<16x128xbf16> to vector<16x128xf32>
    %40 = arith.mulf %39, %38 : vector<16x128xf32>
    %41 = arith.mulf %30, %36 : vector<16x128xf32>
    %42 = arith.addf %40, %41 : vector<16x128xf32>
    %43 = arith.truncf %42 : vector<16x128xf32> to vector<16x128xbf16>
    %c0_22 = arith.constant 0 : index
    %c0_23 = arith.constant 0 : index
    %c0_24 = arith.constant 0 : index
    %44 = vector.load %arg6[%c0_22, %c0_23, %c0_24] : memref<1x128x128xbf16, #tpu.memory_space<vmem>>, vector<1x128x128xbf16>
    %45 = vector.shape_cast %44 : vector<1x128x128xbf16> to vector<128x128xbf16>
    %cst_25 = arith.constant dense<0.000000e+00> : vector<16x128xf32>
    %46 = tpu.matmul %43, %45, %cst_25 {dimension_numbers = #tpu.dot_dimension_numbers<[1], [1], [0], [0], [0, 0, 1, 0], [], []>} : vector<16x128xbf16>, vector<128x128xbf16>, vector<16x128xf32> -> vector<16x128xf32>
    %c0_26 = arith.constant 0 : index
    %c0_27 = arith.constant 0 : index
    %c0_28 = arith.constant 0 : index
    %47 = vector.load %arg8[%c0_26, %c0_27, %c0_28] : memref<1x1x128xi32, #tpu.memory_space<vmem>>, vector<1x1x128xi32>
    %48 = vector.shape_cast %47 : vector<1x1x128xi32> to vector<1x128xi32>
    %c0_i32 = arith.constant 0 : i32
    %49 = vector.broadcast %c0_i32 : i32 to vector<1x128xi32>
    %50 = arith.cmpi sgt, %48, %49 : vector<1x128xi32>
    %cst_29 = arith.constant 0xFF800000 : f32
    %51 = vector.shape_cast %50 : vector<1x128xi1> to vector<1x128xi1>
    %52 = vector.broadcast %51 : vector<1x128xi1> to vector<16x128xi1>
    %53 = vector.broadcast %cst_29 : f32 to vector<16x128xf32>
    %54 = arith.select %52, %46, %53 : vector<16x128xi1>, vector<16x128xf32>
    %c0_30 = arith.constant 0 : index
    %c0_31 = arith.constant 0 : index
    %c0_32 = arith.constant 0 : index
    %55 = vector.load %arg14[%c0_30, %c0_31, %c0_32] : memref<1x16x256xf32, #tpu.memory_space<vmem>>, vector<1x16x128xf32>
    %56 = vector.shape_cast %55 : vector<1x16x128xf32> to vector<16x128xf32>
    %57 = vector.shape_cast %54 : vector<16x128xf32> to vector<1x16x128xf32>
    tpu.vector_store %arg14[%c0_30, %c0_31, %c0_32], %57 {strides = array<i32>} : memref<1x16x256xf32, #tpu.memory_space<vmem>>, vector<1x16x128xf32>,
    %c0_33 = arith.constant 0 : index
    %c0_34 = arith.constant 0 : index
    %c0_35 = arith.constant 0 : index
    %58 = vector.load %arg7[%c0_33, %c0_34, %c0_35] : memref<1x128x128xbf16, #tpu.memory_space<vmem>>, vector<1x128x128xbf16>
    %59 = vector.shape_cast %58 : vector<1x128x128xbf16> to vector<128x128xbf16>
    %cst_36 = arith.constant dense<0.000000e+00> : vector<16x128xf32>
    %60 = tpu.matmul %43, %59, %cst_36 {dimension_numbers = #tpu.dot_dimension_numbers<[1], [1], [0], [0], [0, 0, 1, 0], [], []>} : vector<16x128xbf16>, vector<128x128xbf16>, vector<16x128xf32> -> vector<16x128xf32>
    %61 = arith.index_cast %arg0 : i32 to index
    %62 = memref.load %arg2[%61] : memref<2xi32, #tpu.memory_space<smem>>
    %63 = tpu.iota {dimensions = array<i32: 1>} : vector<1x128xi32>
    %64 = vector.broadcast %62 : i32 to vector<1x128xi32>
    %65 = arith.cmpi slt, %63, %64 : vector<1x128xi32>
    %cst_37 = arith.constant 0xFF800000 : f32
    %66 = vector.shape_cast %65 : vector<1x128xi1> to vector<1x128xi1>
    %67 = vector.broadcast %66 : vector<1x128xi1> to vector<16x128xi1>
    %68 = vector.broadcast %cst_37 : f32 to vector<16x128xf32>
    %69 = arith.select %67, %60, %68 : vector<16x128xi1>, vector<16x128xf32>
    %c0_38 = arith.constant 0 : index
    %c0_39 = arith.constant 0 : index
    %c128 = arith.constant 128 : index
    %70 = vector.load %arg14[%c0_38, %c0_39, %c128] : memref<1x16x256xf32, #tpu.memory_space<vmem>>, vector<1x16x128xf32>
    %71 = vector.shape_cast %70 : vector<1x16x128xf32> to vector<16x128xf32>
    %72 = vector.shape_cast %69 : vector<16x128xf32> to vector<1x16x128xf32>
    tpu.vector_store %arg14[%c0_38, %c0_39, %c128], %72 {strides = array<i32>} : memref<1x16x256xf32, #tpu.memory_space<vmem>>, vector<1x16x128xf32>,
    return
  }
  func.func @transform_0(%arg0: i32, %arg1: i32, %arg2: memref<2xi32, #tpu.memory_space<smem>>, %arg3: memref<1xf32, #tpu.memory_space<smem>>) -> (i32, i32, i32) {
    %c0_i32 = arith.constant 0 : i32
    %c0_i32_0 = arith.constant 0 : i32
    return %arg0, %arg1, %c0_i32 : i32, i32, i32
  }
  func.func @transform_1(%arg0: i32, %arg1: i32, %arg2: memref<2xi32, #tpu.memory_space<smem>>, %arg3: memref<1xf32, #tpu.memory_space<smem>>) -> (i32, i32, i32) {
    %c0_i32 = arith.constant 0 : i32
    %c0_i32_0 = arith.constant 0 : i32
    return %arg0, %arg1, %c0_i32 : i32, i32, i32
  }
  func.func @transform_2(%arg0: i32, %arg1: i32, %arg2: memref<2xi32, #tpu.memory_space<smem>>, %arg3: memref<1xf32, #tpu.memory_space<smem>>) -> (i32, i32, i32) {
    %c0_i32 = arith.constant 0 : i32
    %c0_i32_0 = arith.constant 0 : i32
    %c0_i32_1 = arith.constant 0 : i32
    return %arg0, %c0_i32, %c0_i32_0 : i32, i32, i32
  }
  func.func @transform_3(%arg0: i32, %arg1: i32, %arg2: memref<2xi32, #tpu.memory_space<smem>>, %arg3: memref<1xf32, #tpu.memory_space<smem>>) -> (i32, i32, i32) {
    %c0_i32 = arith.constant 0 : i32
    %c0_i32_0 = arith.constant 0 : i32
    %c0_i32_1 = arith.constant 0 : i32
    return %arg0, %c0_i32, %c0_i32_0 : i32, i32, i32
  }
  func.func @transform_4(%arg0: i32, %arg1: i32, %arg2: memref<2xi32, #tpu.memory_space<smem>>, %arg3: memref<1xf32, #tpu.memory_space<smem>>) -> (i32, i32, i32) {
    %c0_i32 = arith.constant 0 : i32
    %c0_i32_0 = arith.constant 0 : i32
    %c0_i32_1 = arith.constant 0 : i32
    return %arg0, %c0_i32, %c0_i32_0 : i32, i32, i32
  }
  func.func @transform_5(%arg0: i32, %arg1: i32, %arg2: memref<2xi32, #tpu.memory_space<smem>>, %arg3: memref<1xf32, #tpu.memory_space<smem>>) -> (i32, i32) {
    %c0_i32 = arith.constant 0 : i32
    %c0_i32_0 = arith.constant 0 : i32
    %c0_i32_1 = arith.constant 0 : i32
    return %c0_i32, %c0_i32_0 : i32, i32
  }
  func.func @transform_6(%arg0: i32, %arg1: i32, %arg2: memref<2xi32, #tpu.memory_space<smem>>, %arg3: memref<1xf32, #tpu.memory_space<smem>>) -> (i32, i32) {
    %c0_i32 = arith.constant 0 : i32
    %c0_i32_0 = arith.constant 0 : i32
    %c0_i32_1 = arith.constant 0 : i32
    return %c0_i32, %c0_i32_0 : i32, i32
  }
  func.func @transform_7(%arg0: i32, %arg1: i32, %arg2: memref<2xi32, #tpu.memory_space<smem>>, %arg3: memref<1xf32, #tpu.memory_space<smem>>) -> (i32, i32) {
    %c0_i32 = arith.constant 0 : i32
    %c0_i32_0 = arith.constant 0 : i32
    %c0_i32_1 = arith.constant 0 : i32
    return %c0_i32, %c0_i32_0 : i32, i32
  }
  func.func @transform_8(%arg0: i32, %arg1: i32, %arg2: memref<2xi32, #tpu.memory_space<smem>>, %arg3: memref<1xf32, #tpu.memory_space<smem>>) -> (i32, i32) {
    %c0_i32 = arith.constant 0 : i32
    %c0_i32_0 = arith.constant 0 : i32
    %c0_i32_1 = arith.constant 0 : i32
    return %c0_i32, %c0_i32_0 : i32, i32
  }
  func.func @transform_9(%arg0: i32, %arg1: i32, %arg2: memref<2xi32, #tpu.memory_space<smem>>, %arg3: memref<1xf32, #tpu.memory_space<smem>>) -> (i32, i32, i32) {
    %c0_i32 = arith.constant 0 : i32
    %c0_i32_0 = arith.constant 0 : i32
    return %arg0, %c0_i32, %arg1 : i32, i32, i32
  }
  func.func @transform_10(%arg0: i32, %arg1: i32, %arg2: memref<2xi32, #tpu.memory_space<smem>>, %arg3: memref<1xf32, #tpu.memory_space<smem>>) -> (i32, i32, i32) {
    %c0_i32 = arith.constant 0 : i32
    %c0_i32_0 = arith.constant 0 : i32
    return %arg0, %arg1, %c0_i32 : i32, i32, i32
  }
}

</mosaic_0001>

<llo_original>
// kernel: tpu_custom_call.1
$region0: #{tpu_custom_call.1}
  #allocation0 [shape = 'u32[]', space=smem, size = 0x4, offset = 0x4, fixed_abs, tag = 'smem constant byte address 0x4 - core index']
  #allocation1 [shape = 'u32[72,128]{1,0:T(1,128)}', space=vmem, size = 0x9000, scoped, tag = 'internal scratch']
  #allocation2 [shape = 's32[1]{0}', space=sflag, size = 0x4, scoped, tag = 'scoped memory for tpu_custom_call.1']
  #allocation3 [shape = 'u8[512]{0}', space=smem, size = 0x200, scoped, tag = 'prefetched SMEM operand 0']
  #allocation4 [shape = 'f32[1]{0:T(128)S(6)}', space=smem, size = 0x200, scoped, tag = 'prefetched SMEM operand 1']
  %s0 = inlined_call_operand.vmem [shape: s32[2], index: 0, kind: input, shape index: {}]
  %s1 = inlined_call_operand.<no memory space> [shape: f32[1], index: 1, kind: input, shape index: {}]
  %s2 = inlined_call_operand.vmem [shape: bf16[2,16,128], index: 2, kind: input, shape index: {}]
  %s3 = inlined_call_operand.vmem [shape: f32[2,16,1], index: 3, kind: input, shape index: {}]
  %s4 = inlined_call_operand.hbm [shape: bf16[2,128,128], index: 4, kind: input, shape index: {}]
  %s5 = inlined_call_operand.hbm [shape: bf16[2,128,128], index: 5, kind: input, shape index: {}]
  %s6 = inlined_call_operand.vmem [shape: s32[2,1,128], index: 6, kind: input, shape index: {}]
  %s7 = inlined_call_operand.vmem [shape: bf16[1,128], index: 7, kind: input, shape index: {}]
  %s8 = inlined_call_operand.hbm [shape: bf16[128,256], index: 8, kind: input, shape index: {}]
  %s9 = inlined_call_operand.vmem [shape: f32[1,256], index: 9, kind: input, shape index: {}]
  %s10 = inlined_call_operand.vmem [shape: f32[2,256], index: 10, kind: input, shape index: {}]
  %s11 = inlined_call_operand.hbm [shape: f32[2,1,16], index: 11, kind: output, shape index: {0}]
  %s12 = inlined_call_operand.hbm [shape: f32[2,16,256], index: 12, kind: output, shape index: {1}]
  %13 = xla_tuple %s11, %s12
  %s14 = sld [smem:[#allocation0]]
  $region89: #{tpu_custom_call.1} parent=0
    _
  %s16 = ssub.s32 1, %s14
  %s17 = scalar_select 0, %s16, %s14
  %s19 = sshll.u32 %s0, 4
  %s20 = int_to_ptr.vmem [resolvable:$true] %s19
  %22 = dma.vmem_to_smem %s20, 16, [#allocation3], [#allocation2]
  %23 = sst [smem:[#allocation4]] %s1
  %25 = dma.done [#allocation2], 16
  %26 = sfence
  $region1: #{tpu_custom_call.1} parent=0
    #allocation5 [shape = 'u8[65536]{0}', space=vmem, size = 0x10000, scoped, tag = 'input window, operand 4']
    #allocation6 [shape = 's32[2]{0}', space=sflag, size = 0x8, scoped, tag = 'scoped memory for tpu_custom_call.1']
    #allocation7 [shape = 's32[2]{0}', space=sflag, size = 0x8, scoped, tag = 'scoped memory for tpu_custom_call.1']
    #allocation8 [shape = 'u8[65536]{0}', space=vmem, size = 0x10000, scoped, tag = 'input window, operand 5']
    #allocation9 [shape = 's32[2]{0}', space=sflag, size = 0x8, scoped, tag = 'scoped memory for tpu_custom_call.1']
    #allocation10 [shape = 'u8[65536]{0}', space=vmem, size = 0x10000, scoped, tag = 'input window, operand 8, single buffered']
    #allocation11 [shape = 'u8[1024]{0}', space=vmem, size = 0x400, scoped, tag = 'output window, operand 0']
    #allocation12 [shape = 'u8[32768]{0}', space=vmem, size = 0x8000, scoped, tag = 'output window, operand 1']
    #allocation13 [shape = 's32[2]{0}', space=sflag, size = 0x8, scoped, tag = 'scoped memory for tpu_custom_call.1']
    %27 = vsyncpa [#allocation6], 0
    %s28 = scalar_lea.sflag [#allocation6], 1
    %29 = vsyncpa %s28, 0
    %30 = vsyncpa [#allocation9], 0
    %s31 = scalar_lea.sflag [#allocation9], 1
    %32 = vsyncpa %s31, 0
    %33 = vsyncpa [#allocation7], 0
    %s34 = scalar_lea.sflag [#allocation7], 1
    %35 = vsyncpa %s34, 0
    %36 = vsyncpa [#allocation13], 0
    %s37 = scalar_lea.sflag [#allocation13], 1
    %38 = vsyncpa %s37, 0
    loop: start=0, step=1, limit=4
    $region2: #{tpu_custom_call.1} parent=1 // loop_pre_header
      _
    $region3: #{tpu_custom_call.1} parent=1 // loop_header
      %s40 = sphi 0, %s44
      %p41 = scmp.ge.s32.totalorder %s40, 4
      %s47 = sphi 0, %s59
      %s48 = sphi 0, %s55
      %s49 = sphi 0, %s47
      %s50 = sphi 0, %s48
      %s51 = sphi 0, %s49
      %s52 = sphi 0, %s50
      %s64 = sphi 0, %s66
      %s67 = sphi 0, %s64
      %s68 = sphi 0, %s67
      %s84 = sphi 0, %s68
      %s92 = sphi 0, %s94
      %s95 = sphi 0, %s92
      %s96 = sphi 0, %s95
      %s112 = sphi 0, %s96
      %s118 = sphi 0, %s120
      %s121 = sphi 0, %s118
      %s122 = sphi 0, %s121
      %s138 = sphi 0, %s122
      %s144 = sphi 0, %s146
      %s147 = sphi 0, %s144
      %s148 = sphi 0, %s147
      %s164 = sphi 0, %s148
      %s170 = sphi 0, %s172
      %s173 = sphi 0, %s170
      %s174 = sphi 0, %s173
      %s190 = sphi 0, %s174
      %s194 = sphi 0, %s194
      %s196 = sphi 0, %s194
      %s197 = sphi 0, %s196
      %s211 = sphi 0, %s197
      %s215 = sphi 0, %s215
      %s217 = sphi 0, %s215
      %s218 = sphi 0, %s217
      %s232 = sphi 0, %s218
      %s236 = sphi 0, %s236
      %s238 = sphi 0, %s236
      %s239 = sphi 0, %s238
      %s253 = sphi 0, %s239
      %s257 = sphi 0, %s257
      %s259 = sphi 0, %s257
      %s260 = sphi 0, %s259
      %s274 = sphi 0, %s260
      %s282 = sphi 0, %s284
      %s285 = sphi 0, %s282
      %s286 = sphi 0, %s285
      %s302 = sphi 0, %s286
      %s310 = sphi 0, %s312
      %s313 = sphi 0, %s310
      %s314 = sphi 0, %s313
      %s330 = sphi 0, %s314
    $region4: #{tpu_custom_call.1} parent=1 // loop_header_branch
      %43 = sbr.rel (%p41) target = $region8
    $region5: #{tpu_custom_call.1} parent=1 // loop_body
      %s45 = ssub.s32 %s40, 1
      %s46 = ssub.s32 %s40, 2
      %s53 = sadd.s32 1, %s48
      %p54 = scmp.ge.s32.totalorder %s53, 1
      %s55 = scalar_select %p54, 0, %s53
      %s56 = sadd.s32 1, %s47
      %s57 = scalar_select %p54, %s56, %s47
      %p58 = scmp.ge.s32.totalorder %s57, 2
      %s59 = scalar_select %p58, 0, %s57
      %s60 = ssub.s32 %s47, %s59
      %s61 = ssub.s32 %s48, %s55
      %s62 = sor.u32 %s60, %s61
      %p63 = scmp.eq.s32.totalorder %s62, 0
      %s65 = sadd.s32 %s64, 1
      %s66 = scalar_select %p63, %s64, %s65
      %p69 = pneg %p63
      %p70 = scmp.eq.s32.totalorder %s40, 1
      %p71 = por %p69, %p70
      %p72 = scmp.ne.s32.totalorder %s64, %s67
      %p73 = scmp.eq.s32.totalorder %s40, 0
      %p74 = por %p72, %p73
      %p75 = scmp.ne.s32.totalorder %s64, %s67
      %p76 = scmp.eq.s32.totalorder %s45, 1
      %p77 = por %p75, %p76
      %p78 = scmp.ne.s32.totalorder %s67, %s68
      %p79 = scmp.eq.s32.totalorder %s45, 0
      %p80 = por %p78, %p79
      %p81 = scmp.ne.s32.totalorder %s67, %s68
      %p82 = scmp.eq.s32.totalorder %s46, 1
      %p83 = por %p81, %p82
      %p85 = scmp.ne.s32.totalorder %s68, %s84
      %p86 = scmp.eq.s32.totalorder %s46, 0
      %p87 = por %p85, %p86
      %s88 = ssub.s32 %s47, %s59
      %s89 = ssub.s32 %s48, %s55
      %s90 = sor.u32 %s88, %s89
      %p91 = scmp.eq.s32.totalorder %s90, 0
      %s93 = sadd.s32 %s92, 1
      %s94 = scalar_select %p91, %s92, %s93
      %p97 = pneg %p91
      %p98 = scmp.eq.s32.totalorder %s40, 1
      %p99 = por %p97, %p98
      %p100 = scmp.ne.s32.totalorder %s92, %s95
      %p101 = scmp.eq.s32.totalorder %s40, 0
      %p102 = por %p100, %p101
      %p103 = scmp.ne.s32.totalorder %s92, %s95
      %p104 = scmp.eq.s32.totalorder %s45, 1
      %p105 = por %p103, %p104
      %p106 = scmp.ne.s32.totalorder %s95, %s96
      %p107 = scmp.eq.s32.totalorder %s45, 0
      %p108 = por %p106, %p107
      %p109 = scmp.ne.s32.totalorder %s95, %s96
      %p110 = scmp.eq.s32.totalorder %s46, 1
      %p111 = por %p109, %p110
      %p113 = scmp.ne.s32.totalorder %s96, %s112
      %p114 = scmp.eq.s32.totalorder %s46, 0
      %p115 = por %p113, %p114
      %s116 = ssub.s32 %s47, %s59
      %p117 = scmp.eq.s32.totalorder %s116, 0
      %s119 = sadd.s32 %s118, 1
      %s120 = scalar_select %p117, %s118, %s119
      %p123 = pneg %p117
      %p124 = scmp.eq.s32.totalorder %s40, 1
      %p125 = por %p123, %p124
      %p126 = scmp.ne.s32.totalorder %s118, %s121
      %p127 = scmp.eq.s32.totalorder %s40, 0
      %p128 = por %p126, %p127
      %p129 = scmp.ne.s32.totalorder %s118, %s121
      %p130 = scmp.eq.s32.totalorder %s45, 1
      %p131 = por %p129, %p130
      %p132 = scmp.ne.s32.totalorder %s121, %s122
      %p133 = scmp.eq.s32.totalorder %s45, 0
      %p134 = por %p132, %p133
      %p135 = scmp.ne.s32.totalorder %s121, %s122
      %p136 = scmp.eq.s32.totalorder %s46, 1
      %p137 = por %p135, %p136
      %p139 = scmp.ne.s32.totalorder %s122, %s138
      %p140 = scmp.eq.s32.totalorder %s46, 0
      %p141 = por %p139, %p140
      %s142 = ssub.s32 %s47, %s59
      %p143 = scmp.eq.s32.totalorder %s142, 0
      %s145 = sadd.s32 %s144, 1
      %s146 = scalar_select %p143, %s144, %s145
      %p149 = pneg %p143
      %p150 = scmp.eq.s32.totalorder %s40, 1
      %p151 = por %p149, %p150
      %p152 = scmp.ne.s32.totalorder %s144, %s147
      %p153 = scmp.eq.s32.totalorder %s40, 0
      %p154 = por %p152, %p153
      %p155 = scmp.ne.s32.totalorder %s144, %s147
      %p156 = scmp.eq.s32.totalorder %s45, 1
      %p157 = por %p155, %p156
      %p158 = scmp.ne.s32.totalorder %s147, %s148
      %p159 = scmp.eq.s32.totalorder %s45, 0
      %p160 = por %p158, %p159
      %p161 = scmp.ne.s32.totalorder %s147, %s148
      %p162 = scmp.eq.s32.totalorder %s46, 1
      %p163 = por %p161, %p162
      %p165 = scmp.ne.s32.totalorder %s148, %s164
      %p166 = scmp.eq.s32.totalorder %s46, 0
      %p167 = por %p165, %p166
      %s168 = ssub.s32 %s47, %s59
      %p169 = scmp.eq.s32.totalorder %s168, 0
      %s171 = sadd.s32 %s170, 1
      %s172 = scalar_select %p169, %s170, %s171
      %p175 = pneg %p169
      %p176 = scmp.eq.s32.totalorder %s40, 1
      %p177 = por %p175, %p176
      %p178 = scmp.ne.s32.totalorder %s170, %s173
      %p179 = scmp.eq.s32.totalorder %s40, 0
      %p180 = por %p178, %p179
      %p181 = scmp.ne.s32.totalorder %s170, %s173
      %p182 = scmp.eq.s32.totalorder %s45, 1
      %p183 = por %p181, %p182
      %p184 = scmp.ne.s32.totalorder %s173, %s174
      %p185 = scmp.eq.s32.totalorder %s45, 0
      %p186 = por %p184, %p185
      %p187 = scmp.ne.s32.totalorder %s173, %s174
      %p188 = scmp.eq.s32.totalorder %s46, 1
      %p189 = por %p187, %p188
      %p191 = scmp.ne.s32.totalorder %s174, %s190
      %p192 = scmp.eq.s32.totalorder %s46, 0
      %p193 = por %p191, %p192
      %s195 = sadd.s32 %s194, 1
      %p198 = scmp.eq.s32.totalorder %s40, 1
      %p199 = scmp.ne.s32.totalorder %s194, %s196
      %p200 = scmp.eq.s32.totalorder %s40, 0
      %p201 = por %p199, %p200
      %p202 = scmp.ne.s32.totalorder %s194, %s196
      %p203 = scmp.eq.s32.totalorder %s45, 1
      %p204 = por %p202, %p203
      %p205 = scmp.ne.s32.totalorder %s196, %s197
      %p206 = scmp.eq.s32.totalorder %s45, 0
      %p207 = por %p205, %p206
      %p208 = scmp.ne.s32.totalorder %s196, %s197
      %p209 = scmp.eq.s32.totalorder %s46, 1
      %p210 = por %p208, %p209
      %p212 = scmp.ne.s32.totalorder %s197, %s211
      %p213 = scmp.eq.s32.totalorder %s46, 0
      %p214 = por %p212, %p213
      %s216 = sadd.s32 %s215, 1
      %p219 = scmp.eq.s32.totalorder %s40, 1
      %p220 = scmp.ne.s32.totalorder %s215, %s217
      %p221 = scmp.eq.s32.totalorder %s40, 0
      %p222 = por %p220, %p221
      %p223 = scmp.ne.s32.totalorder %s215, %s217
      %p224 = scmp.eq.s32.totalorder %s45, 1
      %p225 = por %p223, %p224
      %p226 = scmp.ne.s32.totalorder %s217, %s218
      %p227 = scmp.eq.s32.totalorder %s45, 0
      %p228 = por %p226, %p227
      %p229 = scmp.ne.s32.totalorder %s217, %s218
      %p230 = scmp.eq.s32.totalorder %s46, 1
      %p231 = por %p229, %p230
      %p233 = scmp.ne.s32.totalorder %s218, %s232
      %p234 = scmp.eq.s32.totalorder %s46, 0
      %p235 = por %p233, %p234
      %s237 = sadd.s32 %s236, 1
      %p240 = scmp.eq.s32.totalorder %s40, 1
      %p241 = scmp.ne.s32.totalorder %s236, %s238
      %p242 = scmp.eq.s32.totalorder %s40, 0
      %p243 = por %p241, %p242
      %p244 = scmp.ne.s32.totalorder %s236, %s238
      %p245 = scmp.eq.s32.totalorder %s45, 1
      %p246 = por %p244, %p245
      %p247 = scmp.ne.s32.totalorder %s238, %s239
      %p248 = scmp.eq.s32.totalorder %s45, 0
      %p249 = por %p247, %p248
      %p250 = scmp.ne.s32.totalorder %s238, %s239
      %p251 = scmp.eq.s32.totalorder %s46, 1
      %p252 = por %p250, %p251
      %p254 = scmp.ne.s32.totalorder %s239, %s253
      %p255 = scmp.eq.s32.totalorder %s46, 0
      %p256 = por %p254, %p255
      %s258 = sadd.s32 %s257, 1
      %p261 = scmp.eq.s32.totalorder %s40, 1
      %p262 = scmp.ne.s32.totalorder %s257, %s259
      %p263 = scmp.eq.s32.totalorder %s40, 0
      %p264 = por %p262, %p263
      %p265 = scmp.ne.s32.totalorder %s257, %s259
      %p266 = scmp.eq.s32.totalorder %s45, 1
      %p267 = por %p265, %p266
      %p268 = scmp.ne.s32.totalorder %s259, %s260
      %p269 = scmp.eq.s32.totalorder %s45, 0
      %p270 = por %p268, %p269
      %p271 = scmp.ne.s32.totalorder %s259, %s260
      %p272 = scmp.eq.s32.totalorder %s46, 1
      %p273 = por %p271, %p272
      %p275 = scmp.ne.s32.totalorder %s260, %s274
      %p276 = scmp.eq.s32.totalorder %s46, 0
      %p277 = por %p275, %p276
      %s278 = ssub.s32 %s47, %s59
      %s279 = ssub.s32 %s48, %s55
      %s280 = sor.u32 %s278, %s279
      %p281 = scmp.eq.s32.totalorder %s280, 0
      %s283 = sadd.s32 %s282, 1
      %s284 = scalar_select %p281, %s282, %s283
      %p287 = pneg %p281
      %p288 = scmp.eq.s32.totalorder %s40, 1
      %p289 = por %p287, %p288
      %p290 = scmp.ne.s32.totalorder %s282, %s285
      %p291 = scmp.eq.s32.totalorder %s40, 0
      %p292 = por %p290, %p291
      %p293 = scmp.ne.s32.totalorder %s282, %s285
      %p294 = scmp.eq.s32.totalorder %s45, 1
      %p295 = por %p293, %p294
      %p296 = scmp.ne.s32.totalorder %s285, %s286
      %p297 = scmp.eq.s32.totalorder %s45, 0
      %p298 = por %p296, %p297
      %p299 = scmp.ne.s32.totalorder %s285, %s286
      %p300 = scmp.eq.s32.totalorder %s46, 1
      %p301 = por %p299, %p300
      %p303 = scmp.ne.s32.totalorder %s286, %s302
      %p304 = scmp.eq.s32.totalorder %s46, 0
      %p305 = por %p303, %p304
      %s306 = ssub.s32 %s47, %s59
      %s307 = ssub.s32 %s48, %s55
      %s308 = sor.u32 %s306, %s307
      %p309 = scmp.eq.s32.totalorder %s308, 0
      %s311 = sadd.s32 %s310, 1
      %s312 = scalar_select %p309, %s310, %s311
      %p315 = pneg %p309
      %p316 = scmp.eq.s32.totalorder %s40, 1
      %p317 = por %p315, %p316
      %p318 = scmp.ne.s32.totalorder %s310, %s313
      %p319 = scmp.eq.s32.totalorder %s40, 0
      %p320 = por %p318, %p319
      %p321 = scmp.ne.s32.totalorder %s310, %s313
      %p322 = scmp.eq.s32.totalorder %s45, 1
      %p323 = por %p321, %p322
      %p324 = scmp.ne.s32.totalorder %s313, %s314
      %p325 = scmp.eq.s32.totalorder %s45, 0
      %p326 = por %p324, %p325
      %p327 = scmp.ne.s32.totalorder %s313, %s314
      %p328 = scmp.eq.s32.totalorder %s46, 1
      %p329 = por %p327, %p328
      %p331 = scmp.ne.s32.totalorder %s314, %s330
      %p332 = scmp.eq.s32.totalorder %s46, 0
      %p333 = por %p331, %p332
      %p334 = scmp.le.s32.totalorder 1, %s40
      %p335 = scmp.lt.s32.totalorder %s40, 3
      %p336 = pnand %p334, %p335
      %p337 = pneg %p336
      // Predicated region
      $region9: #{tpu_custom_call.1} parent=5 // pred_check
        _
      $region10: #{tpu_custom_call.1} parent=5 // pred_check_branch
        %339 = sbr.rel (%p336) target = $region12
      $region11: #{tpu_custom_call.1} parent=5 // pred_region
        %s340 = ssub.s32 %s40, 1
        // Predicated region
        $region13: #{tpu_custom_call.1} parent=11 // pred_check
          %p341 = pneg %p207
        $region14: #{tpu_custom_call.1} parent=11 // pred_check_branch
          %343 = sbr.rel (%p341) target = $region16
        $region15: #{tpu_custom_call.1} parent=11 // pred_region
          _
        $region16: #{tpu_custom_call.1} parent=11 // pred_fallthru
          _
        // Predicated region
        $region17: #{tpu_custom_call.1} parent=11 // pred_check
          %p344 = pneg %p228
        $region18: #{tpu_custom_call.1} parent=11 // pred_check_branch
          %346 = sbr.rel (%p344) target = $region20
        $region19: #{tpu_custom_call.1} parent=11 // pred_region
          %348 = vsyncadd [#allocation9], 0
          %s349 = sshll.u32 %s8, 4
          %s350 = int_to_ptr.hbm [resolvable:$true] %s349
          %s351 = sshll.u32 [#allocation10], 4
          %s352 = int_to_ptr.vmem [resolvable:$true] %s351
          %357 = dma.hbm_to_vmem [thread:$0]  %s350, 2048, %s352, [#allocation9], 128, 128, 8
        $region20: #{tpu_custom_call.1} parent=11 // pred_fallthru
          _
        // Predicated region
        $region21: #{tpu_custom_call.1} parent=11 // pred_check
          %p358 = pneg %p249
        $region22: #{tpu_custom_call.1} parent=11 // pred_check_branch
          %360 = sbr.rel (%p358) target = $region24
        $region23: #{tpu_custom_call.1} parent=11 // pred_region
          _
        $region24: #{tpu_custom_call.1} parent=11 // pred_fallthru
          _
        // Predicated region
        $region25: #{tpu_custom_call.1} parent=11 // pred_check
          %p361 = pneg %p270
        $region26: #{tpu_custom_call.1} parent=11 // pred_check_branch
          %363 = sbr.rel (%p361) target = $region28
        $region27: #{tpu_custom_call.1} parent=11 // pred_region
          _
        $region28: #{tpu_custom_call.1} parent=11 // pred_fallthru
          _
      $region12: #{tpu_custom_call.1} parent=5 // pred_fallthru
        _
      %p364 = scmp.lt.s32.totalorder %s40, 2
      // Predicated region
      $region29: #{tpu_custom_call.1} parent=5 // pred_check
        %p365 = pneg %p364
      $region30: #{tpu_custom_call.1} parent=5 // pred_check_branch
        %367 = sbr.rel (%p365) target = $region32
      $region31: #{tpu_custom_call.1} parent=5 // pred_region
        // Predicated region
        $region33: #{tpu_custom_call.1} parent=31 // pred_check
          %p368 = pneg %p74
        $region34: #{tpu_custom_call.1} parent=31 // pred_check_branch
          %370 = sbr.rel (%p368) target = $region36
        $region35: #{tpu_custom_call.1} parent=31 // pred_region
          %s371 = smul.u32 2, %s48
          %p372 = scmp.lt.s32.totalorder %s47, 1
          %s373 = scalar_select %p372, %s47, 1
          %p374 = scmp.lt.s32.totalorder %s371, 1
          %s375 = scalar_select %p374, %s371, 1
          %s376 = smul.addr %s373, 2
          %s377 = sadd.s32 %s375, %s376
          %s378 = smul.addr %s377, 4
          %s379 = scalar_lea.vmem %s2, %s378
          %s380 = smul.u32 2, %s48
        $region36: #{tpu_custom_call.1} parent=31 // pred_fallthru
          _
        // Predicated region
        $region37: #{tpu_custom_call.1} parent=31 // pred_check
          %p381 = pneg %p102
        $region38: #{tpu_custom_call.1} parent=31 // pred_check_branch
          %383 = sbr.rel (%p381) target = $region40
        $region39: #{tpu_custom_call.1} parent=31 // pred_region
          %s384 = smul.u32 2, %s48
          %p385 = scmp.lt.s32.totalorder %s47, 1
          %s386 = scalar_select %p385, %s47, 1
          %p387 = scmp.lt.s32.totalorder %s384, 1
          %s388 = scalar_select %p387, %s384, 1
          %s389 = smul.addr %s386, 2
          %s390 = sadd.s32 %s388, %s389
          %s391 = smul.addr %s390, 8
          %s392 = scalar_lea.vmem %s3, %s391
          %s393 = smul.u32 2, %s48
        $region40: #{tpu_custom_call.1} parent=31 // pred_fallthru
          _
        // Predicated region
        $region41: #{tpu_custom_call.1} parent=31 // pred_check
          %p394 = pneg %p128
        $region42: #{tpu_custom_call.1} parent=31 // pred_check_branch
          %396 = sbr.rel (%p394) target = $region44
        $region43: #{tpu_custom_call.1} parent=31 // pred_region
          %s397 = sand.u32 %s118, 1
          %s398 = scalar_lea.sflag [#allocation6], %s397
          %s399 = sand.u32 %s118, 1
          %s400 = smul.addr %s399, 64
          %s401 = scalar_lea.vmem [#allocation5], %s400
          %403 = vsyncadd %s398, 0
          %s404 = smul.addr %s47, 16
          %s405 = smul.addr %s404, 4
          %s406 = scalar_lea.hbm %s4, %s405
          %s407 = sshll.u32 %s406, 4
          %s408 = int_to_ptr.hbm [resolvable:$true] %s407
          %s409 = sshll.u32 %s401, 4
          %s410 = int_to_ptr.vmem [resolvable:$true] %s409
          %415 = dma.hbm_to_vmem [thread:$0]  %s408, 1024, %s410, %s398, 64, 64, 4
        $region44: #{tpu_custom_call.1} parent=31 // pred_fallthru
          _
        // Predicated region
        $region45: #{tpu_custom_call.1} parent=31 // pred_check
          %p416 = pneg %p154
        $region46: #{tpu_custom_call.1} parent=31 // pred_check_branch
          %418 = sbr.rel (%p416) target = $region48
        $region47: #{tpu_custom_call.1} parent=31 // pred_region
          %s419 = sand.u32 %s40, 1
          %s420 = scalar_lea.sflag [#allocation9], %s419
          %s421 = sand.u32 %s144, 1
          %s422 = smul.addr %s421, 64
          %s423 = scalar_lea.vmem [#allocation8], %s422
          %425 = vsyncadd %s420, 0
          %s426 = smul.addr %s47, 16
          %s427 = smul.addr %s426, 4
          %s428 = scalar_lea.hbm %s5, %s427
          %s429 = sshll.u32 %s428, 4
          %s430 = int_to_ptr.hbm [resolvable:$true] %s429
          %s431 = sshll.u32 %s423, 4
          %s432 = int_to_ptr.vmem [resolvable:$true] %s431
          %437 = dma.hbm_to_vmem [thread:$0]  %s430, 1024, %s432, %s420, 64, 64, 4
        $region48: #{tpu_custom_call.1} parent=31 // pred_fallthru
          _
        // Predicated region
        $region49: #{tpu_custom_call.1} parent=31 // pred_check
          %p438 = pneg %p180
        $region50: #{tpu_custom_call.1} parent=31 // pred_check_branch
          %440 = sbr.rel (%p438) target = $region52
        $region51: #{tpu_custom_call.1} parent=31 // pred_region
          %p441 = scmp.lt.s32.totalorder %s47, 1
          %s442 = scalar_select %p441, %s47, 1
          %s443 = scalar_lea.vmem %s6, %s442
        $region52: #{tpu_custom_call.1} parent=31 // pred_fallthru
          _
      $region32: #{tpu_custom_call.1} parent=5 // pred_fallthru
        _
      %p444 = scmp.le.s32.totalorder 1, %s40
      %p445 = scmp.lt.s32.totalorder %s40, 3
      %p446 = pnand %p444, %p445
      %p447 = pneg %p446
      // Predicated region
      $region53: #{tpu_custom_call.1} parent=5 // pred_check
        _
      $region54: #{tpu_custom_call.1} parent=5 // pred_check_branch
        %449 = sbr.rel (%p446) target = $region56
      $region55: #{tpu_custom_call.1} parent=5 // pred_region
        %s450 = ssub.s32 %s40, 1
        %s451 = sand.u32 %s121, 1
        %s452 = scalar_lea.sflag [#allocation6], %s451
        %s453 = sand.u32 %s121, 1
        %s454 = smul.addr %s453, 64
        %s455 = scalar_lea.vmem [#allocation5], %s454
        // Predicated region
        $region57: #{tpu_custom_call.1} parent=55 // pred_check
          %p456 = pneg %p134
        $region58: #{tpu_custom_call.1} parent=55 // pred_check_branch
          %458 = sbr.rel (%p456) target = $region60
        $region59: #{tpu_custom_call.1} parent=55 // pred_region
          %460 = dma.done %s452, 1024
        $region60: #{tpu_custom_call.1} parent=55 // pred_fallthru
          _
        %s461 = sand.u32 %s45, 1
        %s462 = scalar_lea.sflag [#allocation9], %s461
        %s463 = sand.u32 %s147, 1
        %s464 = smul.addr %s463, 64
        %s465 = scalar_lea.vmem [#allocation8], %s464
        // Predicated region
        $region61: #{tpu_custom_call.1} parent=55 // pred_check
          %p466 = pneg %p160
        $region62: #{tpu_custom_call.1} parent=55 // pred_check_branch
          %468 = sbr.rel (%p466) target = $region64
        $region63: #{tpu_custom_call.1} parent=55 // pred_region
          %470 = dma.done %s462, 1024
        $region64: #{tpu_custom_call.1} parent=55 // pred_fallthru
          _
        // Predicated region
        $region65: #{tpu_custom_call.1} parent=55 // pred_check
          %p471 = pneg %p228
        $region66: #{tpu_custom_call.1} parent=55 // pred_check_branch
          %473 = sbr.rel (%p471) target = $region68
        $region67: #{tpu_custom_call.1} parent=55 // pred_region
          %475 = dma.done [#allocation9], 2048
        $region68: #{tpu_custom_call.1} parent=55 // pred_fallthru
          _
        %s476 = smul.u32 2, %s50
        %p477 = scmp.lt.s32.totalorder %s49, 1
        %s478 = scalar_select %p477, %s49, 1
        %p479 = scmp.lt.s32.totalorder %s476, 1
        %s480 = scalar_select %p479, %s476, 1
        %s481 = smul.addr %s478, 2
        %s482 = sadd.s32 %s480, %s481
        %s483 = smul.addr %s482, 4
        %s484 = scalar_lea.vmem %s2, %s483
        %p485 = pneg %p80
        %p486 = pneg %p77
        %s487 = smul.u32 2, %s50
        %p488 = scmp.lt.s32.totalorder %s49, 1
        %s489 = scalar_select %p488, %s49, 1
        %p490 = scmp.lt.s32.totalorder %s487, 1
        %s491 = scalar_select %p490, %s487, 1
        %s492 = smul.addr %s489, 2
        %s493 = sadd.s32 %s491, %s492
        %s494 = smul.addr %s493, 8
        %s495 = scalar_lea.vmem %s3, %s494
        %p496 = pneg %p108
        %p497 = pneg %p105
        %s498 = sand.u32 %s121, 1
        %s499 = scalar_lea.sflag [#allocation6], %s498
        %s500 = sand.u32 %s121, 1
        %s501 = smul.addr %s500, 64
        %s502 = scalar_lea.vmem [#allocation5], %s501
        %p503 = pneg %p134
        %p504 = pneg %p131
        %s505 = sand.u32 %s45, 1
        %s506 = scalar_lea.sflag [#allocation9], %s505
        %s507 = sand.u32 %s147, 1
        %s508 = smul.addr %s507, 64
        %s509 = scalar_lea.vmem [#allocation8], %s508
        %p510 = pneg %p160
        %p511 = pneg %p157
        %p512 = scmp.lt.s32.totalorder %s49, 1
        %s513 = scalar_select %p512, %s49, 1
        %s514 = scalar_lea.vmem %s6, %s513
        %p515 = pneg %p186
        %p516 = pneg %p183
        %p517 = pneg %p207
        %p518 = pneg %p204
        %p519 = pneg %p228
        %p520 = pneg %p225
        %p521 = pneg %p249
        %p522 = pneg %p246
        %p523 = pneg %p270
        %p524 = pneg %p267
        %p525 = pneg %p298
        %p526 = pneg %p295
        %s527 = sand.u32 %s285, 1
        %s528 = scalar_lea.sflag [#allocation7], %s527
        %s529 = sand.u32 %s285, 1
        %s530 = scalar_lea.vmem [#allocation11], %s529
        %p531 = pneg %p326
        %p532 = pneg %p323
        %s533 = sand.u32 %s313, 1
        %s534 = scalar_lea.sflag [#allocation13], %s533
        %s535 = sand.u32 %s313, 1
        %s536 = smul.addr %s535, 32
        %s537 = scalar_lea.vmem [#allocation12], %s536
        %s538 = smul.u32 2, %s50
        %p539 = scmp.lt.s32.totalorder %s49, 1
        %s540 = scalar_select %p539, %s49, 1
        %p541 = scmp.lt.s32.totalorder %s538, 1
        %s542 = scalar_select %p541, %s538, 1
        %s543 = smul.addr %s540, 2
        %s544 = sadd.s32 %s542, %s543
        %s545 = smul.addr %s544, 4
        %s546 = scalar_lea.vmem %s2, %s545
        %s547 = smul.u32 2, %s50
        %s548 = smul.u32 2, %s50
        %p549 = scmp.lt.s32.totalorder %s49, 1
        %s550 = scalar_select %p549, %s49, 1
        %p551 = scmp.lt.s32.totalorder %s548, 1
        %s552 = scalar_select %p551, %s548, 1
        %s553 = smul.addr %s550, 2
        %s554 = sadd.s32 %s552, %s553
        %s555 = smul.addr %s554, 8
        %s556 = scalar_lea.vmem %s3, %s555
        %s557 = smul.u32 2, %s50
        %p558 = scmp.lt.s32.totalorder %s49, 1
        %s559 = scalar_select %p558, %s49, 1
        %s560 = scalar_lea.vmem %s6, %s559
        %s561 = smul.u32 2, %s50
        %v563 = vld [vmem:[%s546] sm:$0xf]
        %v564 = vld [vmem:[%s546 + $0x4] sm:$0xf]
        %s565 = sld [smem:[#allocation4]]
        %v566 = vld [vmem:[%s7] sm:$0x1]
        %v567 = vstv %s565
        %v570 = vunpack.c.l.b16 %v563
        %v571 = vunpack.c.l.b16 %v564
        %v572 = vpack.c.b16 %v571, %v570
        %574 = vmatpush.bf16.xpose.msra.mxu0 0
        %575 = vmatpush.bf16.xpose.msra.mxu0 0
        %576 = vmatpush.bf16.xpose.msra.mxu0 0
        %577 = vmatpush.bf16.xpose.msra.mxu0 0
        %578 = vmatpush.bf16.xpose.msra.mxu0 0
        %579 = vmatpush.bf16.xpose.msra.mxu0 0
        %580 = vmatpush.bf16.xpose.msra.mxu0 0
        %581 = vmatpush.bf16.xpose.msra.mxu0 %v572
        %582 = vmatmul.bf16.gmra.mxu0 %v566
        %v583 = vpop.f32.mrf.mxu0
        %v584 = vadd.f32 %v567, %v583
        %v585 = vpop.f32.mrf.mxu0
        %586 = vdwg.mxu0
        %vm587 = vcmask 122880
        %588 = vst.msk [vmem:[%s530] sm:$0x1] %vm587, %v584
        %v589 = vld [vmem:[%s556] sm:$0xff]
        %v590 = vld [vmem:[%s556 + $0x8] sm:$0xff]
        %v591 = vld [vmem:[#allocation10] sm:$0xff]
        %v592 = vld [vmem:[#allocation10 + $0x8] sm:$0xff]
        %v593 = vld [vmem:[#allocation10 + $0x10] sm:$0xff]
        %v594 = vld [vmem:[#allocation10 + $0x18] sm:$0xff]
        %v595 = vld [vmem:[#allocation10 + $0x20] sm:$0xff]
        %v596 = vld [vmem:[#allocation10 + $0x28] sm:$0xff]
        %v597 = vld [vmem:[#allocation10 + $0x30] sm:$0xff]
        %v598 = vld [vmem:[#allocation10 + $0x38] sm:$0xff]
        %v599 = vld [vmem:[#allocation10 + $0x40] sm:$0xff]
        %v600 = vld [vmem:[#allocation10 + $0x48] sm:$0xff]
        %v601 = vld [vmem:[#allocation10 + $0x50] sm:$0xff]
        %v602 = vld [vmem:[#allocation10 + $0x58] sm:$0xff]
        %v603 = vld [vmem:[#allocation10 + $0x60] sm:$0xff]
        %v604 = vld [vmem:[#allocation10 + $0x68] sm:$0xff]
        %v605 = vld [vmem:[#allocation10 + $0x70] sm:$0xff]
        %v606 = vld [vmem:[#allocation10 + $0x78] sm:$0xff]
        %v607 = vld [vmem:[%s10] ss:$2 sm:$0x3]
        %s608 = scalar_lea.vmem %s10, 1
        %v609 = vld [vmem:[%s608] ss:$2 sm:$0x3]
        %v610 = vld [vmem:[%s9] sm:$0x3]
        %v612 = vperm.slane %v610, 0
        %v613 = vperm.slane %v610, 1
        %v632 = vunpack.c.l.b16 %v591
        %v633 = vunpack.c.h.b16 %v591
        %v634 = vunpack.c.l.b16 %v592
        %v635 = vunpack.c.h.b16 %v592
        %v636 = vunpack.c.l.b16 %v593
        %v637 = vunpack.c.h.b16 %v593
        %v638 = vunpack.c.l.b16 %v594
        %v639 = vunpack.c.h.b16 %v594
        %v640 = vunpack.c.l.b16 %v595
        %v641 = vunpack.c.h.b16 %v595
        %v642 = vunpack.c.l.b16 %v596
        %v643 = vunpack.c.h.b16 %v596
        %v644 = vunpack.c.l.b16 %v597
        %v645 = vunpack.c.h.b16 %v597
        %v646 = vunpack.c.l.b16 %v598
        %v647 = vunpack.c.h.b16 %v598
        %v648 = vunpack.c.l.b16 %v599
        %v649 = vunpack.c.h.b16 %v599
        %v650 = vunpack.c.l.b16 %v600
        %v651 = vunpack.c.h.b16 %v600
        %v652 = vunpack.c.l.b16 %v601
        %v653 = vunpack.c.h.b16 %v601
        %v654 = vunpack.c.l.b16 %v602
        %v655 = vunpack.c.h.b16 %v602
        %v656 = vunpack.c.l.b16 %v603
        %v657 = vunpack.c.h.b16 %v603
        %v658 = vunpack.c.l.b16 %v604
        %v659 = vunpack.c.h.b16 %v604
        %v660 = vunpack.c.l.b16 %v605
        %v661 = vunpack.c.h.b16 %v605
        %v662 = vunpack.c.l.b16 %v606
        %v663 = vunpack.c.h.b16 %v606
        %v664 = vpack.c.b16 %v634, %v632
        %v665 = vpack.c.b16 %v635, %v633
        %v666 = vpack.c.b16 %v638, %v636
        %v667 = vpack.c.b16 %v639, %v637
        %v668 = vpack.c.b16 %v642, %v640
        %v669 = vpack.c.b16 %v643, %v641
        %v670 = vpack.c.b16 %v646, %v644
        %v671 = vpack.c.b16 %v647, %v645
        %v672 = vpack.c.b16 %v650, %v648
        %v673 = vpack.c.b16 %v651, %v649
        %v674 = vpack.c.b16 %v654, %v652
        %v675 = vpack.c.b16 %v655, %v653
        %v676 = vpack.c.b16 %v658, %v656
        %v677 = vpack.c.b16 %v659, %v657
        %v678 = vpack.c.b16 %v662, %v660
        %v679 = vpack.c.b16 %v663, %v661
        %696 = vmatpush.bf16.msra.mxu0 %v678
        %697 = vmatpush.bf16.msra.mxu0 %v676
        %698 = vmatpush.bf16.msra.mxu0 %v674
        %699 = vmatpush.bf16.msra.mxu0 %v672
        %700 = vmatpush.bf16.msra.mxu0 %v670
        %701 = vmatpush.bf16.msra.mxu0 %v668
        %702 = vmatpush.bf16.msra.mxu0 %v666
        %703 = vmatpush.bf16.msra.mxu0 %v664
        %704 = vmatmul.bf16.gmra.mxu0 %v572
        %v705 = vpop.f32.mrf.mxu0
        %v706 = vadd.f32 %v612, %v705
        %v707 = vpop.f32.mrf.mxu0
        %v708 = vadd.f32 %v612, %v707
        %709 = vdwg.mxu0
        %710 = vmatpush.bf16.msra.mxu0 %v679
        %711 = vmatpush.bf16.msra.mxu0 %v677
        %712 = vmatpush.bf16.msra.mxu0 %v675
        %713 = vmatpush.bf16.msra.mxu0 %v673
        %714 = vmatpush.bf16.msra.mxu0 %v671
        %715 = vmatpush.bf16.msra.mxu0 %v669
        %716 = vmatpush.bf16.msra.mxu0 %v667
        %717 = vmatpush.bf16.msra.mxu0 %v665
        %718 = vmatmul.bf16.gmra.mxu0 %v572
        %v719 = vpop.f32.mrf.mxu0
        %v720 = vadd.f32 %v613, %v719
        %v721 = vpop.f32.mrf.mxu0
        %v722 = vadd.f32 %v613, %v721
        %723 = vdwg.mxu0
        %v724 = vsub.f32 1.0, %v589
        %v725 = vsub.f32 1.0, %v590
        %v727 = vperm.slane %v607, 0
        %v728 = vperm.slane %v607, 1
        %732 = vset.pattern.permute.xlu0 0
        %733 = vperm.xlu0 %732, %v724
        %v734 = vpop.permute.xlu0 %733
        %737 = vset.pattern.permute.xlu0 0
        %738 = vperm.xlu0 %737, %v725
        %v739 = vpop.permute.xlu0 %738
        %v741 = vmul.f32 %v727, %v734
        %v742 = vmul.f32 %v728, %v734
        %v743 = vmul.f32 %v727, %v739
        %v744 = vmul.f32 %v728, %v739
        %v745 = vadd.f32 %v706, %v741
        %v746 = vadd.f32 %v720, %v742
        %v747 = vadd.f32 %v708, %v743
        %v748 = vadd.f32 %v722, %v744
        %v750 = vperm.slane %v609, 0
        %v751 = vperm.slane %v609, 1
        %755 = vset.pattern.permute.xlu0 0
        %756 = vperm.xlu0 %755, %v589
        %v757 = vpop.permute.xlu0 %756
        %760 = vset.pattern.permute.xlu0 0
        %761 = vperm.xlu0 %760, %v590
        %v762 = vpop.permute.xlu0 %761
        %v764 = vmul.f32 %v750, %v757
        %v765 = vmul.f32 %v751, %v757
        %v766 = vmul.f32 %v750, %v762
        %v767 = vmul.f32 %v751, %v762
        %v768 = vadd.f32 %v745, %v764
        %v769 = vadd.f32 %v746, %v765
        %v770 = vadd.f32 %v747, %v766
        %v771 = vadd.f32 %v748, %v767
        %v772 = vtanh.pop %v768
        %v773 = vtanh.pop %v770
        %v774 = vxor.u32 %v769, 2147483648
        %v775 = vxor.u32 %v771, 2147483648
        %v776 = vmul.f32 %v774, 1.442695
        %v777 = vpow.pop %v776
        %v778 = vmul.f32 %v775, 1.442695
        %v779 = vpow.pop %v778
        %v780 = vadd.f32 %v777, 1.0
        %v781 = vadd.f32 %v779, 1.0
        %v782 = vrcp.pop %v780
        %v783 = vmul.f32 %v780, %v782
        %v784 = vsub.f32 1.0, %v783
        %v785 = vmul.f32 %v782, %v784
        %v786 = vadd.f32 %v782, %v785
        %vm787 = vweird.f32 %v780
        %vm788 = vweird.f32 %v782
        %vm789 = vmor %vm787, %vm788
        %v790 = vsel %vm789, %v782, %v786
        %v791 = vand.u32 2147483647, %v780
        %vm792 = vcmp.eq.f32.partialorder %v791, 8.507059e+37
        %v793 = vand.u32 %v780, 2147483648
        %v794 = vor.u32 1.1754944e-38, %v793
        %v795 = vsel %vm792, %v794, %v790
        %v796 = vmul.f32 1.0, %v795
        %v797 = vrcp.pop %v781
        %v798 = vmul.f32 %v781, %v797
        %v799 = vsub.f32 1.0, %v798
        %v800 = vmul.f32 %v797, %v799
        %v801 = vadd.f32 %v797, %v800
        %vm802 = vweird.f32 %v781
        %vm803 = vweird.f32 %v797
        %vm804 = vmor %vm802, %vm803
        %v805 = vsel %vm804, %v797, %v801
        %v806 = vand.u32 2147483647, %v781
        %vm807 = vcmp.eq.f32.partialorder %v806, 8.507059e+37
        %v808 = vand.u32 %v781, 2147483648
        %v809 = vor.u32 1.1754944e-38, %v808
        %v810 = vsel %vm807, %v809, %v805
        %v811 = vmul.f32 1.0, %v810
        %v812 = vsub.f32 1.0, %v796
        %v813 = vsub.f32 1.0, %v811
        %v814 = vunpack.c.l.bf16 %v563
        %v815 = vunpack.c.l.bf16 %v564
        %v816 = vmul.f32 %v814, %v812
        %v817 = vmul.f32 %v815, %v813
        %v818 = vmul.f32 %v772, %v796
        %v819 = vmul.f32 %v773, %v811
        %v820 = vadd.f32 %v816, %v818
        %v821 = vadd.f32 %v817, %v819
        %v822 = vpack.c.bf16 %v821, %v820
        %v823 = vld [vmem:[%s455] sm:$0xf]
        %v824 = vld [vmem:[%s455 + $0x4] sm:$0xf]
        %v825 = vld [vmem:[%s455 + $0x8] sm:$0xf]
        %v826 = vld [vmem:[%s455 + $0xc] sm:$0xf]
        %v827 = vld [vmem:[%s455 + $0x10] sm:$0xf]
        %v828 = vld [vmem:[%s455 + $0x14] sm:$0xf]
        %v829 = vld [vmem:[%s455 + $0x18] sm:$0xf]
        %v830 = vld [vmem:[%s455 + $0x1c] sm:$0xf]
        %v831 = vld [vmem:[%s455 + $0x20] sm:$0xf]
        %v832 = vld [vmem:[%s455 + $0x24] sm:$0xf]
        %v833 = vld [vmem:[%s455 + $0x28] sm:$0xf]
        %v834 = vld [vmem:[%s455 + $0x2c] sm:$0xf]
        %v835 = vld [vmem:[%s455 + $0x30] sm:$0xf]
        %v836 = vld [vmem:[%s455 + $0x34] sm:$0xf]
        %v837 = vld [vmem:[%s455 + $0x38] sm:$0xf]
        %v838 = vld [vmem:[%s455 + $0x3c] sm:$0xf]
        %v855 = vunpack.c.l.b16 %v823
        %v856 = vunpack.c.l.b16 %v824
        %v857 = vunpack.c.l.b16 %v825
        %v858 = vunpack.c.l.b16 %v826
        %v859 = vunpack.c.l.b16 %v827
        %v860 = vunpack.c.l.b16 %v828
        %v861 = vunpack.c.l.b16 %v829
        %v862 = vunpack.c.l.b16 %v830
        %v863 = vunpack.c.l.b16 %v831
        %v864 = vunpack.c.l.b16 %v832
        %v865 = vunpack.c.l.b16 %v833
        %v866 = vunpack.c.l.b16 %v834
        %v867 = vunpack.c.l.b16 %v835
        %v868 = vunpack.c.l.b16 %v836
        %v869 = vunpack.c.l.b16 %v837
        %v870 = vunpack.c.l.b16 %v838
        %v871 = vpack.c.b16 %v856, %v855
        %v872 = vpack.c.b16 %v858, %v857
        %v873 = vpack.c.b16 %v860, %v859
        %v874 = vpack.c.b16 %v862, %v861
        %v875 = vpack.c.b16 %v864, %v863
        %v876 = vpack.c.b16 %v866, %v865
        %v877 = vpack.c.b16 %v868, %v867
        %v878 = vpack.c.b16 %v870, %v869
        %887 = vmatpush.bf16.xpose.msra.mxu0 %v878
        %888 = vmatpush.bf16.xpose.msra.mxu0 %v877
        %889 = vmatpush.bf16.xpose.msra.mxu0 %v876
        %890 = vmatpush.bf16.xpose.msra.mxu0 %v875
        %891 = vmatpush.bf16.xpose.msra.mxu0 %v874
        %892 = vmatpush.bf16.xpose.msra.mxu0 %v873
        %893 = vmatpush.bf16.xpose.msra.mxu0 %v872
        %894 = vmatpush.bf16.xpose.msra.mxu0 %v871
        %895 = vmatmul.bf16.gmra.mxu0 %v822
        %v896 = vpop.f32.mrf.mxu0
        %v897 = vadd.f32 0.0, %v896
        %v898 = vpop.f32.mrf.mxu0
        %v899 = vadd.f32 0.0, %v898
        %900 = vdwg.mxu0
        %v901 = vld [vmem:[%s560] sm:$0x1]
        %vm902 = vcmp.gt.s32.totalorder %v901, 0
        %v903 = vsel %vm902, 1, 0
        %v904 = vperm.slane %v903, 0
        %vm905 = vcmp.eq.s32.totalorder %v904, 1
        %v906 = vsel %vm905, %v897, -inf
        %v907 = vsel %vm905, %v899, -inf
        %908 = vst [vmem:[%s537] sm:$0xff] %v906
        %909 = vst [vmem:[%s537 + $0x10] sm:$0xff] %v907
        %v910 = vld [vmem:[%s465] sm:$0xf]
        %v911 = vld [vmem:[%s465 + $0x4] sm:$0xf]
        %v912 = vld [vmem:[%s465 + $0x8] sm:$0xf]
        %v913 = vld [vmem:[%s465 + $0xc] sm:$0xf]
        %v914 = vld [vmem:[%s465 + $0x10] sm:$0xf]
        %v915 = vld [vmem:[%s465 + $0x14] sm:$0xf]
        %v916 = vld [vmem:[%s465 + $0x18] sm:$0xf]
        %v917 = vld [vmem:[%s465 + $0x1c] sm:$0xf]
        %v918 = vld [vmem:[%s465 + $0x20] sm:$0xf]
        %v919 = vld [vmem:[%s465 + $0x24] sm:$0xf]
        %v920 = vld [vmem:[%s465 + $0x28] sm:$0xf]
        %v921 = vld [vmem:[%s465 + $0x2c] sm:$0xf]
        %v922 = vld [vmem:[%s465 + $0x30] sm:$0xf]
        %v923 = vld [vmem:[%s465 + $0x34] sm:$0xf]
        %v924 = vld [vmem:[%s465 + $0x38] sm:$0xf]
        %v925 = vld [vmem:[%s465 + $0x3c] sm:$0xf]
        %v942 = vunpack.c.l.b16 %v910
        %v943 = vunpack.c.l.b16 %v911
        %v944 = vunpack.c.l.b16 %v912
        %v945 = vunpack.c.l.b16 %v913
        %v946 = vunpack.c.l.b16 %v914
        %v947 = vunpack.c.l.b16 %v915
        %v948 = vunpack.c.l.b16 %v916
        %v949 = vunpack.c.l.b16 %v917
        %v950 = vunpack.c.l.b16 %v918
        %v951 = vunpack.c.l.b16 %v919
        %v952 = vunpack.c.l.b16 %v920
        %v953 = vunpack.c.l.b16 %v921
        %v954 = vunpack.c.l.b16 %v922
        %v955 = vunpack.c.l.b16 %v923
        %v956 = vunpack.c.l.b16 %v924
        %v957 = vunpack.c.l.b16 %v925
        %v958 = vpack.c.b16 %v943, %v942
        %v959 = vpack.c.b16 %v945, %v944
        %v960 = vpack.c.b16 %v947, %v946
        %v961 = vpack.c.b16 %v949, %v948
        %v962 = vpack.c.b16 %v951, %v950
        %v963 = vpack.c.b16 %v953, %v952
        %v964 = vpack.c.b16 %v955, %v954
        %v965 = vpack.c.b16 %v957, %v956
        %974 = vmatpush.bf16.xpose.msra.mxu0 %v965
        %975 = vmatpush.bf16.xpose.msra.mxu0 %v964
        %976 = vmatpush.bf16.xpose.msra.mxu0 %v963
        %977 = vmatpush.bf16.xpose.msra.mxu0 %v962
        %978 = vmatpush.bf16.xpose.msra.mxu0 %v961
        %979 = vmatpush.bf16.xpose.msra.mxu0 %v960
        %980 = vmatpush.bf16.xpose.msra.mxu0 %v959
        %981 = vmatpush.bf16.xpose.msra.mxu0 %v958
        %982 = vmatmul.bf16.gmra.mxu0 %v822
        %v983 = vpop.f32.mrf.mxu0
        %v984 = vadd.f32 0.0, %v983
        %v985 = vpop.f32.mrf.mxu0
        %v986 = vadd.f32 0.0, %v985
        %987 = vdwg.mxu0
        %s988 = sld [smem:[#allocation3 + %s49]]
        %v989 = vlaneseq
        %v990 = vand.u32 %v989, 127
        %v991 = vstv %s988
        %vm992 = vcmp.lt.s32.totalorder %v990, %v991
        %v993 = vsel %vm992, 1, 0
        %vm994 = vcmp.eq.s32.totalorder %v993, 1
        %v995 = vsel %vm994, %v984, -inf
        %v996 = vsel %vm994, %v986, -inf
        %997 = vst [vmem:[%s537 + $0x8] sm:$0xff] %v995
        %998 = vst [vmem:[%s537 + $0x18] sm:$0xff] %v996
        %s999 = sand.u32 %s285, 1
        %s1000 = scalar_lea.sflag [#allocation7], %s999
        %s1001 = sand.u32 %s285, 1
        %s1002 = scalar_lea.vmem [#allocation11], %s1001
        %s1003 = sand.u32 %s313, 1
        %s1004 = scalar_lea.sflag [#allocation13], %s1003
        %s1005 = sand.u32 %s313, 1
        %s1006 = smul.addr %s1005, 32
        %s1007 = scalar_lea.vmem [#allocation12], %s1006
        // Predicated region
        $region69: #{tpu_custom_call.1} parent=55 // pred_check
          %p1008 = pneg %p295
        $region70: #{tpu_custom_call.1} parent=55 // pred_check_branch
          %1010 = sbr.rel (%p1008) target = $region72
        $region71: #{tpu_custom_call.1} parent=55 // pred_region
          %1012 = vsyncadd %s1000, 0
          %s1013 = sadd.s32 %s50, %s49
          %s1014 = scalar_lea.hbm %s11, %s1013
          %s1016 = sshll.u32 %s1002, 4
          %s1017 = int_to_ptr.vmem [resolvable:$true] %s1016
          %s1018 = sshll.u32 %s1014, 4
          %s1019 = int_to_ptr.hbm [resolvable:$true] %s1018
          %1021 = dma.vmem_to_hbm [thread:$0]  %s1017, 16, %s1019, %s1000
        $region72: #{tpu_custom_call.1} parent=55 // pred_fallthru
          _
        // Predicated region
        $region73: #{tpu_custom_call.1} parent=55 // pred_check
          %p1022 = pneg %p323
        $region74: #{tpu_custom_call.1} parent=55 // pred_check_branch
          %1024 = sbr.rel (%p1022) target = $region76
        $region75: #{tpu_custom_call.1} parent=55 // pred_region
          %s1025 = smul.u32 2, %s50
          %1027 = vsyncadd %s1004, 0
          %s1028 = smul.addr %s1025, 2
          %s1029 = smul.addr %s49, 4
          %s1030 = sadd.s32 %s1028, %s1029
          %s1031 = smul.addr %s1030, 8
          %s1032 = scalar_lea.hbm %s12, %s1031
          %s1033 = sshll.u32 %s1007, 4
          %s1034 = int_to_ptr.vmem [resolvable:$true] %s1033
          %s1035 = sshll.u32 %s1032, 4
          %s1036 = int_to_ptr.hbm [resolvable:$true] %s1035
          %1041 = dma.vmem_to_hbm [thread:$0]  %s1034, 512, %s1036, %s1004, 256, 256, 16
        $region76: #{tpu_custom_call.1} parent=55 // pred_fallthru
          _
      $region56: #{tpu_custom_call.1} parent=5 // pred_fallthru
        _
      %p1042 = scmp.le.s32.totalorder 2, %s40
      // Predicated region
      $region77: #{tpu_custom_call.1} parent=5 // pred_check
        %p1043 = pneg %p1042
      $region78: #{tpu_custom_call.1} parent=5 // pred_check_branch
        %1045 = sbr.rel (%p1043) target = $region80
      $region79: #{tpu_custom_call.1} parent=5 // pred_region
        %s1046 = ssub.s32 %s40, 2
        // Predicated region
        $region81: #{tpu_custom_call.1} parent=79 // pred_check
          %p1047 = pneg %p301
        $region82: #{tpu_custom_call.1} parent=79 // pred_check_branch
          %1049 = sbr.rel (%p1047) target = $region84
        $region83: #{tpu_custom_call.1} parent=79 // pred_region
          %s1050 = sand.u32 %s286, 1
          %s1051 = scalar_lea.sflag [#allocation7], %s1050
          %s1052 = sand.u32 %s286, 1
          %s1053 = scalar_lea.vmem [#allocation11], %s1052
          %1055 = dma.done %s1051, 16
        $region84: #{tpu_custom_call.1} parent=79 // pred_fallthru
          _
        // Predicated region
        $region85: #{tpu_custom_call.1} parent=79 // pred_check
          %p1056 = pneg %p329
        $region86: #{tpu_custom_call.1} parent=79 // pred_check_branch
          %1058 = sbr.rel (%p1056) target = $region88
        $region87: #{tpu_custom_call.1} parent=79 // pred_region
          %s1059 = sand.u32 %s314, 1
          %s1060 = scalar_lea.sflag [#allocation13], %s1059
          %s1061 = sand.u32 %s314, 1
          %s1062 = smul.addr %s1061, 32
          %s1063 = scalar_lea.vmem [#allocation12], %s1062
          %1065 = dma.done %s1060, 512
        $region88: #{tpu_custom_call.1} parent=79 // pred_fallthru
          _
      $region80: #{tpu_custom_call.1} parent=5 // pred_fallthru
        _
    $region6: #{tpu_custom_call.1} parent=1 // loop_footer
      %s44 = sadd.s32 1, %s40
    $region7: #{tpu_custom_call.1} parent=1 // loop_footer_branch
      %39 = sbr.rel target = $region3
    $region8: #{tpu_custom_call.1} parent=1 // loop_exit
      _
    %1066 = vsyncpa [#allocation6], 1
    %s1067 = scalar_lea.sflag [#allocation6], 1
    %1068 = vsyncpa %s1067, 1
    %1069 = vsyncpa [#allocation9], 1
    %s1070 = scalar_lea.sflag [#allocation9], 1
    %1071 = vsyncpa %s1070, 1
    %1072 = vsyncpa [#allocation7], 1
    %s1073 = scalar_lea.sflag [#allocation7], 1
    %1074 = vsyncpa %s1073, 1
    %1075 = vsyncpa [#allocation13], 1
    %s1076 = scalar_lea.sflag [#allocation13], 1
    %1077 = vsyncpa %s1076, 1

</llo_original>
